<compile_context>
chip_gen: v6e
topology: v6e:2x2x1
jax: 0.10.0
libtpu: 0.0.40
codegen_flags: <defaults>
</compile_context>

<pallas_src>
import functools

import jax
import jax.numpy as jnp
import numpy as np
from jax import lax
from jax.experimental import pallas as pl
from jax.experimental.pallas import tpu as pltpu


# ---------------------------------------------------------------------------
# Pallas kernel: one batch-group (TB batches lane-stacked) per grid step.
# ---------------------------------------------------------------------------
def _hypergraph_kernel(alpha_ref, nf_ref, ohg_ref, ohs_ref, pos_ref, relv_ref,
                       wagg_ref, wnf_ref, bgb_ref, gmat_ref,
                       out_ref, msg_ref, *, num_arity, edge_size):
    A, E = num_arity, edge_size
    mm_dtype = nf_ref.dtype
    alpha = alpha_ref[0, 0]                                           # f32 scalar (SMEM)

    nf = nf_ref[...]                                                  # (N, TB*D) mm_dtype

    # ---- gather via exact 0/1 one-hot matmul; alpha applied in f32 here ----
    gathered = jnp.dot(ohg_ref[...], nf,
                       preferred_element_type=jnp.float32)            # (A*E, TB*D) f32
    # snp = alpha * node + (1 - alpha) * positional  ((1-alpha)*pos precomputed in wrapper)
    snp = alpha * gathered + pos_ref[...]

    # ---- all-but-one product along the arity axis (A small: unrolled, f32) ----
    slices = [snp[a * E:(a + 1) * E, :] for a in range(A)]            # each (E, TB*D)
    prefix = [None] * A
    suffix = [None] * A
    acc = None
    for a in range(1, A):
        acc = slices[a - 1] if acc is None else acc * slices[a - 1]
        prefix[a] = acc
    acc = None
    for a in range(A - 2, -1, -1):
        acc = slices[a + 1] if acc is None else acc * slices[a + 1]
        suffix[a] = acc

    relv = relv_ref[...]                                              # (E, TB*D) f32

    # ---- per-arity messages written into the fused (A*E, TB*D) slab (f32 scratch) ----
    for a in range(A):
        if prefix[a] is None and suffix[a] is None:
            abo = jnp.ones_like(relv)
        elif prefix[a] is None:
            abo = suffix[a]
        elif suffix[a] is None:
            abo = prefix[a]
        else:
            abo = prefix[a] * suffix[a]
        msg_ref[a * E:(a + 1) * E, :] = abo * relv                    # static 8-row aligned write

    # ---- single fused scatter-sum matmul (K = A*E); node-0 row of one-hot is zeroed ----
    msg = msg_ref[...].astype(mm_dtype)                               # (A*E, TB*D)
    agg = jnp.dot(ohs_ref[...], msg,
                  preferred_element_type=jnp.float32)                 # (N, TB*D) f32

    # ---- Linear with split (block-diagonal) weights: agg @ W_agg + nf @ W_nf + b ----
    lin = (jnp.dot(agg.astype(mm_dtype), wagg_ref[...],
                   preferred_element_type=jnp.float32)
           + jnp.dot(nf, wnf_ref[...],
                     preferred_element_type=jnp.float32)
           + bgb_ref[0:1, :])                                         # (N, TB*O)

    # TODO(synk): dropout reproduced as eval-mode identity (training dropout is stochastic).

    # ---- LayerNorm per (batch, node) over each O-lane group via averaging matmul ----
    # (f32-operand dots; the f32 validation path below holds to ~2e-4 without forcing
    #  precision=HIGHEST, so default dot precision is kept.)
    gmat = gmat_ref[...]
    mean = jnp.dot(lin, gmat, preferred_element_type=jnp.float32)
    centered = lin - mean
    var = jnp.dot(centered * centered, gmat, preferred_element_type=jnp.float32)
    out = centered * lax.rsqrt(var + 1e-5) * bgb_ref[1:2, :] + bgb_ref[2:3, :]

    out_ref[...] = out.astype(out_ref.dtype)


# ---------------------------------------------------------------------------
# Wrapper helpers
# ---------------------------------------------------------------------------
def _tpu_generation():
    try:
        kind = jax.devices()[0].device_kind.lower()
    except Exception:
        return 0
    if "v7" in kind or "tpu7" in kind or "7x" in kind:
        return 7
    if "v6" in kind or "tpu6" in kind:
        return 6
    if "v5" in kind:
        return 5
    return 0


def _pick_tb(B, D, target_lanes, min_steps):
    """Smallest divisor of B whose lane width reaches target_lanes while keeping
    at least min_steps grid steps; relax min_steps, then fall back to TB=B."""
    divisors = [t for t in range(1, B + 1) if B % t == 0]
    for t in divisors:
        if t * D >= target_lanes and B // t >= min_steps:
            return t
    for t in divisors:
        if t * D >= target_lanes:
            return t
    return B


def _invariant_spec(shape):
    """Grid-invariant operand: constant index map + single buffer (no double-buffer)."""
    imap = lambda g, _n=len(shape): (0,) * _n
    try:
        return pl.BlockSpec(shape, imap, pipeline_mode=pl.Buffered(1))
    except TypeError:  # older BlockSpec without pipeline_mode
        return pl.BlockSpec(shape, imap)


# ---------------------------------------------------------------------------
# Wrapper: batch-invariant precompute, lane-stacking, BlockSpecs, pallas_call.
# ---------------------------------------------------------------------------
def hypergraph_layer_pallas(node_features, edge_list, rel, params,
                            mm_dtype=jnp.bfloat16, out_dtype=None):
    B, N, D = node_features.shape
    E, A = edge_list.shape
    if out_dtype is None:
        out_dtype = node_features.dtype
    pos_emb = params["pos_emb"].at[0].set(1.0)       # forward() resets row 0 to ones
    rel_emb = params["rel_emb"]
    W, b = params["W"], params["b"]
    gamma, beta = params["gamma"], params["beta"]
    alpha_arr = params["alpha"].astype(jnp.float32).reshape(1, 1)
    alpha = alpha_arr[0, 0]
    O = W.shape[1]

    # TODO(synk): dependent=True (relation_linear on query) and batch_norm branches not implemented.

    # ---------------- batch-invariant precompute (hoisted out of the kernel) ----------------
    # arity-major flattening: row i = a*E + e
    he_flat = edge_list.T.reshape(A * E)
    onehot = (he_flat[:, None] == jnp.arange(N, dtype=he_flat.dtype)[None, :]
              ).astype(jnp.float32)                                   # (A*E, N)
    onehot_gather = onehot.astype(mm_dtype)                           # exact 0/1 (alpha applied in f32 in-kernel)
    # combined transposed scatter one-hot, node-0 row zeroed (=> out[:,0,:]=0 for free)
    ohs_combined = onehot.T.at[0, :].set(0.0).astype(mm_dtype)        # (N, A*E)

    seq = jnp.arange(1, A + 1, dtype=edge_list.dtype)
    pos_idx = jnp.where(edge_list != 0, seq[None, :], 0)              # (E, A)
    pos_enc = pos_emb[pos_idx]                                        # (E, A, D)
    pos_term = (1.0 - alpha) * pos_enc                                # (1-alpha)*pos, hoisted (f32)
    pos_term = jnp.transpose(pos_term, (1, 0, 2)).reshape(A * E, D)   # arity-major
    relv = rel_emb[rel]                                               # (E, D)

    # ---------------- generation-aware lane-stacking of TB batches --------------------------
    gen = _tpu_generation()
    target_lanes, min_steps = {5: (128, 1),   # v5e: 128-lane output tiles fill its 128-wide MXU
                               6: (256, 1),   # v6e: single TC, 256-lane stacks match 2x256 MXU
                               7: (128, 4),   # v7x: keep >=2 grid steps per TensorCore
                               }.get(gen, (128, 2))
    TB = _pick_tb(B, D, target_lanes, min_steps)
    G = B // TB
    TBD, TBO = TB * D, TB * O

    nf = node_features.at[:, 0, :].set(0.0)                           # padding node, once
    nf_stacked = (nf.reshape(G, TB, N, D).transpose(0, 2, 1, 3)
                    .reshape(G, N, TBD).astype(mm_dtype))             # bf16 input -> half DMA

    pos_stacked = jnp.tile(pos_term, (1, TB)).astype(jnp.float32)     # (A*E, TB*D)
    relv_stacked = jnp.tile(relv, (1, TB)).astype(jnp.float32)        # (E, TB*D)

    eye_tb = jnp.eye(TB, dtype=jnp.float32)
    wagg_big = jnp.kron(eye_tb, W[:D].astype(jnp.float32)).astype(mm_dtype)   # (TB*D, TB*O)
    wnf_big = jnp.kron(eye_tb, W[D:].astype(jnp.float32)).astype(mm_dtype)    # (TB*D, TB*O)
    bgb = jnp.tile(jnp.concatenate([b.reshape(1, O), gamma.reshape(1, O),
                                    beta.reshape(1, O)], axis=0),
                   (1, TB)).astype(jnp.float32)                       # (3, TB*O): bias/gamma/beta merged
    gmat = jnp.kron(eye_tb, jnp.full((O, O), 1.0 / O, jnp.float32))   # LN group-mean matrix

    kernel = functools.partial(_hypergraph_kernel, num_arity=A, edge_size=E)

    # explicit VMEM budget: invariants single-buffered, nf/out double-buffered, + msg scratch
    mmb = jnp.dtype(mm_dtype).itemsize
    outb = jnp.dtype(out_dtype).itemsize
    est = ((A * E) * N * mmb + N * (A * E) * mmb
           + (A * E) * TBD * 4 + E * TBD * 4
           + 2 * TBD * TBO * mmb + 3 * TBO * 4 + TBO * TBO * 4
           + 2 * N * TBD * mmb + 2 * N * TBO * outb
           + (A * E) * TBD * 4)
    vmem_limit = int(min(max(4 * est + (16 << 20), 32 << 20), 64 << 20))

    out_stacked = pl.pallas_call(
        kernel,
        out_shape=jax.ShapeDtypeStruct((G, N, TBO), out_dtype),
        grid=(G,),
        in_specs=[
            pl.BlockSpec(memory_space=pltpu.MemorySpace.SMEM),        # alpha scalar
            pl.BlockSpec((pl.Squeezed(), N, TBD), lambda g: (g, 0, 0)),  # lane-stacked node feats
            _invariant_spec((A * E, N)),                              # gather one-hot (0/1, mm_dtype)
            _invariant_spec((N, A * E)),                              # fused scatter one-hot
            _invariant_spec((A * E, TBD)),                            # (1-alpha)*pos, lane-tiled
            _invariant_spec((E, TBD)),                                # relation vectors
            _invariant_spec((TBD, TBO)),                              # block-diag W_agg
            _invariant_spec((TBD, TBO)),                              # block-diag W_nf
            _invariant_spec((3, TBO)),                                # merged bias/gamma/beta
            _invariant_spec((TBO, TBO)),                              # LN group-mean matrix
        ],
        out_specs=pl.BlockSpec((pl.Squeezed(), N, TBO), lambda g: (g, 0, 0)),
        scratch_shapes=[pltpu.VMEM((A * E, TBD), jnp.float32)],       # fused message slab
        compiler_params=pltpu.CompilerParams(
            dimension_semantics=("parallel",),
            vmem_limit_bytes=vmem_limit),
    )(alpha_arr, nf_stacked, onehot_gather, ohs_combined, pos_stacked, relv_stacked,
      wagg_big, wnf_big, bgb, gmat)

    # un-stack lanes back to (B, N, O)
    # TODO(synk): fuse this un-stack into the consumer at production scale (extra HBM pass).
    out = out_stacked.reshape(G, N, TB, O).transpose(0, 2, 1, 3).reshape(B, N, O)
    return out


# ---------------------------------------------------------------------------
# Pure-JAX reference (mirrors the PyTorch forward, eval-mode dropout)
# ---------------------------------------------------------------------------
def hypergraph_layer_ref(node_features, edge_list, rel, params):
    B, N, D = node_features.shape
    E, A = edge_list.shape
    pos_emb = params["pos_emb"].at[0].set(1.0)
    rel_emb = params["rel_emb"]
    W, b = params["W"], params["b"]
    gamma, beta = params["gamma"], params["beta"]
    alpha = params["alpha"][0, 0]

    nf = node_features.at[:, 0, :].set(0.0)
    gathered = nf[:, edge_list, :]                                   # (B, E, A, D)
    seq = jnp.arange(1, A + 1)
    pos_idx = jnp.where(edge_list != 0, seq[None, :], 0)
    pos_enc = pos_emb[pos_idx]                                       # (E, A, D)
    snp = alpha * gathered + (1.0 - alpha) * pos_enc[None]

    cf = jnp.cumprod(snp, axis=2)
    cb = jnp.flip(jnp.cumprod(jnp.flip(snp, axis=2), axis=2), axis=2)
    sf = jnp.concatenate([jnp.ones((B, E, 1, D)), cf[:, :, :-1, :]], axis=2)
    sb = jnp.concatenate([cb[:, :, 1:, :], jnp.ones((B, E, 1, D))], axis=2)
    abo = sf * sb

    msg = abo * rel_emb[rel][None, :, None, :]
    msg_flat = msg.reshape(B, E * A, D)
    idx = edge_list.reshape(-1)
    agg = jax.vmap(lambda m: jax.ops.segment_sum(m, idx, num_segments=N))(msg_flat)
    agg = agg.at[:, 0, :].set(0.0)

    cat = jnp.concatenate([agg, nf], axis=-1)
    lin = cat @ W + b[0]
    mean = lin.mean(-1, keepdims=True)
    var = ((lin - mean) ** 2).mean(-1, keepdims=True)
    return (lin - mean) / jnp.sqrt(var + 1e-5) * gamma[0] + beta[0]


# ---------------------------------------------------------------------------
if __name__ == "__main__":
    B, N = 8, 16                 # batch, nodes (node 0 is the padding node)
    D, O = 32, 32                # in_channels, out_channels
    E, A = 8, 6                  # hyperedges, max_arity
    R = 4                        # num_relation

    key = jax.random.PRNGKey(0)
    k1, k2, k3, k4, k5, k6, k7 = jax.random.split(key, 7)

    node_features = jax.random.normal(k1, (B, N, D), jnp.float32)
    edge_list = jax.random.randint(k2, (E, A), 0, N, jnp.int32)      # zeros act as padding slots
    rel = jax.random.randint(k3, (E,), 0, R, jnp.int32)

    params = {
        "pos_emb": jax.random.normal(k4, (A + 1, D), jnp.float32),
        "rel_emb": jax.random.normal(k5, (R, D), jnp.float32),
        "W": jax.random.normal(k6, (2 * D, O), jnp.float32) * 0.1,   # Linear weight (transposed)
        "b": jax.random.normal(k7, (1, O), jnp.float32) * 0.01,
        "gamma": jnp.ones((1, O), jnp.float32),
        "beta": jnp.zeros((1, O), jnp.float32),
        "alpha": jnp.full((1, 1), 0.5, jnp.float32),
    }

    ref = hypergraph_layer_ref(node_features, edge_list, rel, params)

    # Performance path: bf16 MXU operands + bf16 input/output, f32 accumulation / elementwise.
    out_bf16 = hypergraph_layer_pallas(node_features, edge_list, rel, params,
                                       mm_dtype=jnp.bfloat16, out_dtype=jnp.bfloat16)
    out_bf16 = jax.block_until_ready(out_bf16)
    np.testing.assert_allclose(np.asarray(out_bf16.astype(jnp.float32)), np.asarray(ref),
                               rtol=5e-2, atol=3e-1)

    # f32 path of the same kernel: validates exact semantics at tight tolerance.
    out_f32 = hypergraph_layer_pallas(node_features, edge_list, rel, params,
                                      mm_dtype=jnp.float32, out_dtype=jnp.float32)
    out_f32 = jax.block_until_ready(out_f32)
    np.testing.assert_allclose(np.asarray(out_f32), np.asarray(ref),
                               rtol=2e-4, atol=2e-4)

    print("KERNEL_OK")
</pallas_src>

<mosaic_0001>
module attributes {stable_mosaic.version = 11 : i64} {
  func.func @_hypergraph_kernel(%arg0: i32, %arg1: memref<1x1xf32, #tpu.memory_space<smem>>, %arg2: memref<1x16x128xbf16, #tpu.memory_space<vmem>>, %arg3: memref<48x16xbf16, #tpu.memory_space<vmem>>, %arg4: memref<16x48xbf16, #tpu.memory_space<vmem>>, %arg5: memref<48x128xf32, #tpu.memory_space<vmem>>, %arg6: memref<8x128xf32, #tpu.memory_space<vmem>>, %arg7: memref<128x128xbf16, #tpu.memory_space<vmem>>, %arg8: memref<128x128xbf16, #tpu.memory_space<vmem>>, %arg9: memref<3x128xf32, #tpu.memory_space<vmem>>, %arg10: memref<128x128xf32, #tpu.memory_space<vmem>>, %arg11: memref<1x16x128xbf16, #tpu.memory_space<vmem>>, %arg12: memref<48x128xf32, #tpu.memory_space<vmem>>) attributes {dimension_semantics = [#tpu.dimension_semantics<parallel>], iteration_bounds = array<i64: 2>, scalar_prefetch = 0 : i64, scratch_operands = 1 : i64, tpu.core_type = #tpu.core_type<tc>, window_params = [{transform_indices = @transform_0, window_bounds = array<i64: 1, 1>}, {transform_indices = @transform_1, window_bounds = array<i64: 1, 16, 128>}, {pipeline_mode = #tpu.pipeline_mode<synchronous>, transform_indices = @transform_2, window_bounds = array<i64: 48, 16>}, {pipeline_mode = #tpu.pipeline_mode<synchronous>, transform_indices = @transform_3, window_bounds = array<i64: 16, 48>}, {pipeline_mode = #tpu.pipeline_mode<synchronous>, transform_indices = @transform_4, window_bounds = array<i64: 48, 128>}, {pipeline_mode = #tpu.pipeline_mode<synchronous>, transform_indices = @transform_5, window_bounds = array<i64: 8, 128>}, {pipeline_mode = #tpu.pipeline_mode<synchronous>, transform_indices = @transform_6, window_bounds = array<i64: 128, 128>}, {pipeline_mode = #tpu.pipeline_mode<synchronous>, transform_indices = @transform_7, window_bounds = array<i64: 128, 128>}, {pipeline_mode = #tpu.pipeline_mode<synchronous>, transform_indices = @transform_8, window_bounds = array<i64: 3, 128>}, {pipeline_mode = #tpu.pipeline_mode<synchronous>, transform_indices = @transform_9, window_bounds = array<i64: 128, 128>}, {transform_indices = @transform_10, window_bounds = array<i64: 1, 16, 128>}]} {
    %c0 = arith.constant 0 : index
    %c0_0 = arith.constant 0 : index
    %0 = memref.load %arg1[%c0, %c0_0] : memref<1x1xf32, #tpu.memory_space<smem>>
    %c0_1 = arith.constant 0 : index
    %c0_2 = arith.constant 0 : index
    %c0_3 = arith.constant 0 : index
    %1 = vector.load %arg2[%c0_1, %c0_2, %c0_3] : memref<1x16x128xbf16, #tpu.memory_space<vmem>>, vector<1x16x128xbf16>
    %2 = vector.shape_cast %1 : vector<1x16x128xbf16> to vector<16x128xbf16>
    %c0_4 = arith.constant 0 : index
    %c0_5 = arith.constant 0 : index
    %3 = vector.load %arg3[%c0_4, %c0_5] : memref<48x16xbf16, #tpu.memory_space<vmem>>, vector<48x16xbf16>
    %cst = arith.constant dense<0.000000e+00> : vector<48x128xf32>
    %4 = tpu.matmul %3, %2, %cst {dimension_numbers = #tpu.dot_dimension_numbers<[1], [0], [0], [1], [0, 0, 1, 1], [], []>} : vector<48x16xbf16>, vector<16x128xbf16>, vector<48x128xf32> -> vector<48x128xf32>
    %5 = vector.broadcast %0 : f32 to vector<48x128xf32>
    %6 = arith.mulf %5, %4 : vector<48x128xf32>
    %c0_6 = arith.constant 0 : index
    %c0_7 = arith.constant 0 : index
    %7 = vector.load %arg5[%c0_6, %c0_7] : memref<48x128xf32, #tpu.memory_space<vmem>>, vector<48x128xf32>
    %8 = arith.addf %6, %7 : vector<48x128xf32>
    %9 = vector.extract_strided_slice %8 {offsets = [0, 0], sizes = [8, 128], strides = [1, 1]} : vector<48x128xf32> to vector<8x128xf32>
    %10 = vector.extract_strided_slice %8 {offsets = [8, 0], sizes = [8, 128], strides = [1, 1]} : vector<48x128xf32> to vector<8x128xf32>
    %11 = vector.extract_strided_slice %8 {offsets = [16, 0], sizes = [8, 128], strides = [1, 1]} : vector<48x128xf32> to vector<8x128xf32>
    %12 = vector.extract_strided_slice %8 {offsets = [24, 0], sizes = [8, 128], strides = [1, 1]} : vector<48x128xf32> to vector<8x128xf32>
    %13 = vector.extract_strided_slice %8 {offsets = [32, 0], sizes = [8, 128], strides = [1, 1]} : vector<48x128xf32> to vector<8x128xf32>
    %14 = vector.extract_strided_slice %8 {offsets = [40, 0], sizes = [8, 128], strides = [1, 1]} : vector<48x128xf32> to vector<8x128xf32>
    %15 = arith.mulf %9, %10 : vector<8x128xf32>
    %16 = arith.mulf %15, %11 : vector<8x128xf32>
    %17 = arith.mulf %16, %12 : vector<8x128xf32>
    %18 = arith.mulf %17, %13 : vector<8x128xf32>
    %19 = arith.mulf %14, %13 : vector<8x128xf32>
    %20 = arith.mulf %19, %12 : vector<8x128xf32>
    %21 = arith.mulf %20, %11 : vector<8x128xf32>
    %22 = arith.mulf %21, %10 : vector<8x128xf32>
    %c0_8 = arith.constant 0 : index
    %c0_9 = arith.constant 0 : index
    %23 = vector.load %arg6[%c0_8, %c0_9] : memref<8x128xf32, #tpu.memory_space<vmem>>, vector<8x128xf32>
    %24 = arith.mulf %22, %23 : vector<8x128xf32>
    %c0_10 = arith.constant 0 : index
    %c0_11 = arith.constant 0 : index
    %25 = vector.load %arg12[%c0_10, %c0_11] : memref<48x128xf32, #tpu.memory_space<vmem>>, vector<8x128xf32>
    tpu.vector_store %arg12[%c0_10, %c0_11], %24 {strides = array<i32>} : memref<48x128xf32, #tpu.memory_space<vmem>>, vector<8x128xf32>,
    %26 = arith.mulf %9, %21 : vector<8x128xf32>
    %27 = arith.mulf %26, %23 : vector<8x128xf32>
    %c8 = arith.constant 8 : index
    %c0_12 = arith.constant 0 : index
    %28 = vector.load %arg12[%c8, %c0_12] : memref<48x128xf32, #tpu.memory_space<vmem>>, vector<8x128xf32>
    tpu.vector_store %arg12[%c8, %c0_12], %27 {strides = array<i32>} : memref<48x128xf32, #tpu.memory_space<vmem>>, vector<8x128xf32>,
    %29 = arith.mulf %15, %20 : vector<8x128xf32>
    %30 = arith.mulf %29, %23 : vector<8x128xf32>
    %c16 = arith.constant 16 : index
    %c0_13 = arith.constant 0 : index
    %31 = vector.load %arg12[%c16, %c0_13] : memref<48x128xf32, #tpu.memory_space<vmem>>, vector<8x128xf32>
    tpu.vector_store %arg12[%c16, %c0_13], %30 {strides = array<i32>} : memref<48x128xf32, #tpu.memory_space<vmem>>, vector<8x128xf32>,
    %32 = arith.mulf %16, %19 : vector<8x128xf32>
    %33 = arith.mulf %32, %23 : vector<8x128xf32>
    %c24 = arith.constant 24 : index
    %c0_14 = arith.constant 0 : index
    %34 = vector.load %arg12[%c24, %c0_14] : memref<48x128xf32, #tpu.memory_space<vmem>>, vector<8x128xf32>
    tpu.vector_store %arg12[%c24, %c0_14], %33 {strides = array<i32>} : memref<48x128xf32, #tpu.memory_space<vmem>>, vector<8x128xf32>,
    %35 = arith.mulf %17, %14 : vector<8x128xf32>
    %36 = arith.mulf %35, %23 : vector<8x128xf32>
    %c32 = arith.constant 32 : index
    %c0_15 = arith.constant 0 : index
    %37 = vector.load %arg12[%c32, %c0_15] : memref<48x128xf32, #tpu.memory_space<vmem>>, vector<8x128xf32>
    tpu.vector_store %arg12[%c32, %c0_15], %36 {strides = array<i32>} : memref<48x128xf32, #tpu.memory_space<vmem>>, vector<8x128xf32>,
    %38 = arith.mulf %18, %23 : vector<8x128xf32>
    %c40 = arith.constant 40 : index
    %c0_16 = arith.constant 0 : index
    %39 = vector.load %arg12[%c40, %c0_16] : memref<48x128xf32, #tpu.memory_space<vmem>>, vector<8x128xf32>
    tpu.vector_store %arg12[%c40, %c0_16], %38 {strides = array<i32>} : memref<48x128xf32, #tpu.memory_space<vmem>>, vector<8x128xf32>,
    %c0_17 = arith.constant 0 : index
    %c0_18 = arith.constant 0 : index
    %40 = vector.load %arg12[%c0_17, %c0_18] : memref<48x128xf32, #tpu.memory_space<vmem>>, vector<48x128xf32>
    %41 = arith.truncf %40 : vector<48x128xf32> to vector<48x128xbf16>
    %c0_19 = arith.constant 0 : index
    %c0_20 = arith.constant 0 : index
    %42 = vector.load %arg4[%c0_19, %c0_20] : memref<16x48xbf16, #tpu.memory_space<vmem>>, vector<16x48xbf16>
    %cst_21 = arith.constant dense<0.000000e+00> : vector<16x128xf32>
    %43 = tpu.matmul %42, %41, %cst_21 {dimension_numbers = #tpu.dot_dimension_numbers<[1], [0], [0], [1], [0, 0, 1, 1], [], []>} : vector<16x48xbf16>, vector<48x128xbf16>, vector<16x128xf32> -> vector<16x128xf32>
    %44 = arith.truncf %43 : vector<16x128xf32> to vector<16x128xbf16>
    %c0_22 = arith.constant 0 : index
    %c0_23 = arith.constant 0 : index
    %45 = vector.load %arg7[%c0_22, %c0_23] : memref<128x128xbf16, #tpu.memory_space<vmem>>, vector<128x128xbf16>
    %cst_24 = arith.constant dense<0.000000e+00> : vector<16x128xf32>
    %46 = tpu.matmul %44, %45, %cst_24 {dimension_numbers = #tpu.dot_dimension_numbers<[1], [0], [0], [1], [0, 0, 1, 1], [], []>} : vector<16x128xbf16>, vector<128x128xbf16>, vector<16x128xf32> -> vector<16x128xf32>
    %c0_25 = arith.constant 0 : index
    %c0_26 = arith.constant 0 : index
    %47 = vector.load %arg8[%c0_25, %c0_26] : memref<128x128xbf16, #tpu.memory_space<vmem>>, vector<128x128xbf16>
    %cst_27 = arith.constant dense<0.000000e+00> : vector<16x128xf32>
    %48 = tpu.matmul %2, %47, %cst_27 {dimension_numbers = #tpu.dot_dimension_numbers<[1], [0], [0], [1], [0, 0, 1, 1], [], []>} : vector<16x128xbf16>, vector<128x128xbf16>, vector<16x128xf32> -> vector<16x128xf32>
    %49 = arith.addf %46, %48 : vector<16x128xf32>
    %c0_28 = arith.constant 0 : index
    %c0_29 = arith.constant 0 : index
    %50 = vector.load %arg9[%c0_28, %c0_29] : memref<3x128xf32, #tpu.memory_space<vmem>>, vector<1x128xf32>
    %51 = vector.broadcast %50 : vector<1x128xf32> to vector<16x128xf32>
    %52 = arith.addf %49, %51 : vector<16x128xf32>
    %c0_30 = arith.constant 0 : index
    %c0_31 = arith.constant 0 : index
    %53 = vector.load %arg10[%c0_30, %c0_31] : memref<128x128xf32, #tpu.memory_space<vmem>>, vector<128x128xf32>
    %cst_32 = arith.constant dense<0.000000e+00> : vector<16x128xf32>
    %54 = tpu.matmul %52, %53, %cst_32 {dimension_numbers = #tpu.dot_dimension_numbers<[1], [0], [0], [1], [0, 0, 1, 1], [], []>} : vector<16x128xf32>, vector<128x128xf32>, vector<16x128xf32> -> vector<16x128xf32>
    %55 = arith.subf %52, %54 : vector<16x128xf32>
    %56 = arith.mulf %55, %55 : vector<16x128xf32>
    %cst_33 = arith.constant dense<0.000000e+00> : vector<16x128xf32>
    %57 = tpu.matmul %56, %53, %cst_33 {dimension_numbers = #tpu.dot_dimension_numbers<[1], [0], [0], [1], [0, 0, 1, 1], [], []>} : vector<16x128xf32>, vector<128x128xf32>, vector<16x128xf32> -> vector<16x128xf32>
    %cst_34 = arith.constant 9.99999974E-6 : f32
    %58 = vector.broadcast %cst_34 : f32 to vector<16x128xf32>
    %59 = arith.addf %57, %58 : vector<16x128xf32>
    %60 = math.rsqrt %59 : vector<16x128xf32>
    %61 = arith.mulf %55, %60 : vector<16x128xf32>
    %c1 = arith.constant 1 : index
    %c0_35 = arith.constant 0 : index
    %62 = vector.load %arg9[%c1, %c0_35] : memref<3x128xf32, #tpu.memory_space<vmem>>, vector<1x128xf32>
    %63 = vector.broadcast %62 : vector<1x128xf32> to vector<16x128xf32>
    %64 = arith.mulf %61, %63 : vector<16x128xf32>
    %c2 = arith.constant 2 : index
    %c0_36 = arith.constant 0 : index
    %65 = vector.load %arg9[%c2, %c0_36] : memref<3x128xf32, #tpu.memory_space<vmem>>, vector<1x128xf32>
    %66 = vector.broadcast %65 : vector<1x128xf32> to vector<16x128xf32>
    %67 = arith.addf %64, %66 : vector<16x128xf32>
    %68 = arith.truncf %67 : vector<16x128xf32> to vector<16x128xbf16>
    %c0_37 = arith.constant 0 : index
    %c0_38 = arith.constant 0 : index
    %c0_39 = arith.constant 0 : index
    %69 = vector.load %arg11[%c0_37, %c0_38, %c0_39] : memref<1x16x128xbf16, #tpu.memory_space<vmem>>, vector<1x16x128xbf16>
    %70 = vector.shape_cast %69 : vector<1x16x128xbf16> to vector<16x128xbf16>
    %71 = vector.shape_cast %68 : vector<16x128xbf16> to vector<1x16x128xbf16>
    tpu.vector_store %arg11[%c0_37, %c0_38, %c0_39], %71 {strides = array<i32>} : memref<1x16x128xbf16, #tpu.memory_space<vmem>>, vector<1x16x128xbf16>,
    return
  }
  func.func @transform_0(%arg0: i32) -> (i32, i32) {
    %c0_i32 = arith.constant 0 : i32
    %c0_i32_0 = arith.constant 0 : i32
    %c0_i32_1 = arith.constant 0 : i32
    return %c0_i32, %c0_i32_0 : i32, i32
  }
  func.func @transform_1(%arg0: i32) -> (i32, i32, i32) {
    %c0_i32 = arith.constant 0 : i32
    %c0_i32_0 = arith.constant 0 : i32
    %c0_i32_1 = arith.constant 0 : i32
    return %arg0, %c0_i32, %c0_i32_0 : i32, i32, i32
  }
  func.func @transform_2(%arg0: i32) -> (i32, i32) {
    %c0_i32 = arith.constant 0 : i32
    %c0_i32_0 = arith.constant 0 : i32
    %c0_i32_1 = arith.constant 0 : i32
    return %c0_i32, %c0_i32_0 : i32, i32
  }
  func.func @transform_3(%arg0: i32) -> (i32, i32) {
    %c0_i32 = arith.constant 0 : i32
    %c0_i32_0 = arith.constant 0 : i32
    %c0_i32_1 = arith.constant 0 : i32
    return %c0_i32, %c0_i32_0 : i32, i32
  }
  func.func @transform_4(%arg0: i32) -> (i32, i32) {
    %c0_i32 = arith.constant 0 : i32
    %c0_i32_0 = arith.constant 0 : i32
    %c0_i32_1 = arith.constant 0 : i32
    return %c0_i32, %c0_i32_0 : i32, i32
  }
  func.func @transform_5(%arg0: i32) -> (i32, i32) {
    %c0_i32 = arith.constant 0 : i32
    %c0_i32_0 = arith.constant 0 : i32
    %c0_i32_1 = arith.constant 0 : i32
    return %c0_i32, %c0_i32_0 : i32, i32
  }
  func.func @transform_6(%arg0: i32) -> (i32, i32) {
    %c0_i32 = arith.constant 0 : i32
    %c0_i32_0 = arith.constant 0 : i32
    %c0_i32_1 = arith.constant 0 : i32
    return %c0_i32, %c0_i32_0 : i32, i32
  }
  func.func @transform_7(%arg0: i32) -> (i32, i32) {
    %c0_i32 = arith.constant 0 : i32
    %c0_i32_0 = arith.constant 0 : i32
    %c0_i32_1 = arith.constant 0 : i32
    return %c0_i32, %c0_i32_0 : i32, i32
  }
  func.func @transform_8(%arg0: i32) -> (i32, i32) {
    %c0_i32 = arith.constant 0 : i32
    %c0_i32_0 = arith.constant 0 : i32
    %c0_i32_1 = arith.constant 0 : i32
    return %c0_i32, %c0_i32_0 : i32, i32
  }
  func.func @transform_9(%arg0: i32) -> (i32, i32) {
    %c0_i32 = arith.constant 0 : i32
    %c0_i32_0 = arith.constant 0 : i32
    %c0_i32_1 = arith.constant 0 : i32
    return %c0_i32, %c0_i32_0 : i32, i32
  }
  func.func @transform_10(%arg0: i32) -> (i32, i32, i32) {
    %c0_i32 = arith.constant 0 : i32
    %c0_i32_0 = arith.constant 0 : i32
    %c0_i32_1 = arith.constant 0 : i32
    return %arg0, %c0_i32, %c0_i32_0 : i32, i32, i32
  }
}

</mosaic_0001>

<llo_original>
// kernel: tpu_custom_call.1
$region0: #{tpu_custom_call.1}
  #allocation0 [shape = 'u32[]', space=smem, size = 0x4, offset = 0x4, fixed_abs, tag = 'smem constant byte address 0x4 - core index']
  #allocation1 [shape = 'u32[144,128]{1,0:T(1,128)}', space=vmem, size = 0x12000, scoped, tag = 'internal scratch']
  #allocation2 [shape = 'f32[48,128]{1,0:T(8,128)}', space=vmem, size = 0x6000, scoped, tag = 'scratch operand']
  #allocation3 [shape = 'f32[1,1]{1,0:T(1,128)S(6)}', space=smem, size = 0x200, scoped, tag = 'scoped memory for tpu_custom_call.1']
  %s0 = inlined_call_operand.<no memory space> [shape: f32[1,1], index: 0, kind: input, shape index: {}]
  %s1 = inlined_call_operand.vmem [shape: bf16[2,16,128], index: 1, kind: input, shape index: {}]
  %s2 = inlined_call_operand.vmem [shape: bf16[48,16], index: 2, kind: input, shape index: {}]
  %s3 = inlined_call_operand.vmem [shape: bf16[16,48], index: 3, kind: input, shape index: {}]
  %s4 = inlined_call_operand.hbm [shape: f32[48,128], index: 4, kind: input, shape index: {}]
  %s5 = inlined_call_operand.vmem [shape: f32[8,128], index: 5, kind: input, shape index: {}]
  %s6 = inlined_call_operand.hbm [shape: bf16[128,128], index: 6, kind: input, shape index: {}]
  %s7 = inlined_call_operand.hbm [shape: bf16[128,128], index: 7, kind: input, shape index: {}]
  %s8 = inlined_call_operand.vmem [shape: f32[3,128], index: 8, kind: input, shape index: {}]
  %s9 = inlined_call_operand.hbm [shape: f32[128,128], index: 9, kind: input, shape index: {}]
  %s10 = inlined_call_operand.hbm [shape: bf16[2,16,128], index: 10, kind: output, shape index: {}]
  %s11 = sld [smem:[#allocation0]]
  $region89: #{tpu_custom_call.1} parent=0
    _
  %s13 = ssub.s32 1, %s11
  %s14 = scalar_select 0, %s13, %s11
  %15 = sst [smem:[#allocation3]] %s0
  $region1: #{tpu_custom_call.1} parent=0
    #allocation4 [shape = 'u8[24576]{0}', space=vmem, size = 0x6000, scoped, tag = 'input window, operand 4, single buffered']
    #allocation5 [shape = 's32[2]{0}', space=sflag, size = 0x8, scoped, tag = 'scoped memory for tpu_custom_call.1']
    #allocation6 [shape = 's32[2]{0}', space=sflag, size = 0x8, scoped, tag = 'scoped memory for tpu_custom_call.1']
    #allocation7 [shape = 'u8[32768]{0}', space=vmem, size = 0x8000, scoped, tag = 'input window, operand 6, single buffered']
    #allocation8 [shape = 's32[1]{0}', space=sflag, size = 0x4, scoped, tag = 'scoped memory for tpu_custom_call.1']
    #allocation9 [shape = 'u8[32768]{0}', space=vmem, size = 0x8000, scoped, tag = 'input window, operand 7, single buffered']
    #allocation10 [shape = 'u8[65536]{0}', space=vmem, size = 0x10000, scoped, tag = 'input window, operand 9, single buffered']
    #allocation11 [shape = 's32[1]{0}', space=sflag, size = 0x4, scoped, tag = 'scoped memory for tpu_custom_call.1']
    #allocation12 [shape = 'u8[8192]{0}', space=vmem, size = 0x2000, scoped, tag = 'output window, operand 0']
    %16 = vsyncpa [#allocation5], 0
    %17 = vsyncpa [#allocation8], 0
    %18 = vsyncpa [#allocation11], 0
    %19 = vsyncpa [#allocation6], 0
    %s20 = scalar_lea.sflag [#allocation6], 1
    %21 = vsyncpa %s20, 0
    loop: start=0, step=1, limit=4
    $region2: #{tpu_custom_call.1} parent=1 // loop_pre_header
      _
    $region3: #{tpu_custom_call.1} parent=1 // loop_header
      %s23 = sphi 0, %s27
      %p24 = scmp.ge.s32.totalorder %s23, 4
      %s31 = sphi 0, %s31
      %s33 = sphi 0, %s31
      %s34 = sphi 0, %s33
      %s48 = sphi 0, %s34
      %s54 = sphi 0, %s56
      %s57 = sphi 0, %s54
      %s58 = sphi 0, %s57
      %s74 = sphi 0, %s58
      %s78 = sphi 0, %s78
      %s80 = sphi 0, %s78
      %s81 = sphi 0, %s80
      %s95 = sphi 0, %s81
      %s99 = sphi 0, %s99
      %s101 = sphi 0, %s99
      %s102 = sphi 0, %s101
      %s116 = sphi 0, %s102
      %s120 = sphi 0, %s120
      %s122 = sphi 0, %s120
      %s123 = sphi 0, %s122
      %s137 = sphi 0, %s123
      %s141 = sphi 0, %s141
      %s143 = sphi 0, %s141
      %s144 = sphi 0, %s143
      %s158 = sphi 0, %s144
      %s162 = sphi 0, %s162
      %s164 = sphi 0, %s162
      %s165 = sphi 0, %s164
      %s179 = sphi 0, %s165
      %s183 = sphi 0, %s183
      %s185 = sphi 0, %s183
      %s186 = sphi 0, %s185
      %s200 = sphi 0, %s186
      %s204 = sphi 0, %s204
      %s206 = sphi 0, %s204
      %s207 = sphi 0, %s206
      %s221 = sphi 0, %s207
      %s225 = sphi 0, %s225
      %s227 = sphi 0, %s225
      %s228 = sphi 0, %s227
      %s242 = sphi 0, %s228
      %s248 = sphi 0, %s250
      %s251 = sphi 0, %s248
      %s252 = sphi 0, %s251
      %s268 = sphi 0, %s252
    $region4: #{tpu_custom_call.1} parent=1 // loop_header_branch
      %26 = sbr.rel (%p24) target = $region8
    $region5: #{tpu_custom_call.1} parent=1 // loop_body
      %s28 = ssub.s32 %s23, 1
      %s29 = ssub.s32 %s23, 2
      %s30 = sadd.s32 %s23, 1
      %s32 = sadd.s32 %s31, 1
      %p35 = scmp.eq.s32.totalorder %s23, 1
      %p36 = scmp.ne.s32.totalorder %s31, %s33
      %p37 = scmp.eq.s32.totalorder %s23, 0
      %p38 = por %p36, %p37
      %p39 = scmp.ne.s32.totalorder %s31, %s33
      %p40 = scmp.eq.s32.totalorder %s28, 1
      %p41 = por %p39, %p40
      %p42 = scmp.ne.s32.totalorder %s33, %s34
      %p43 = scmp.eq.s32.totalorder %s28, 0
      %p44 = por %p42, %p43
      %p45 = scmp.ne.s32.totalorder %s33, %s34
      %p46 = scmp.eq.s32.totalorder %s29, 1
      %p47 = por %p45, %p46
      %p49 = scmp.ne.s32.totalorder %s34, %s48
      %p50 = scmp.eq.s32.totalorder %s29, 0
      %p51 = por %p49, %p50
      %s52 = ssub.s32 %s23, %s30
      %p53 = scmp.eq.s32.totalorder %s52, 0
      %s55 = sadd.s32 %s54, 1
      %s56 = scalar_select %p53, %s54, %s55
      %p59 = pneg %p53
      %p60 = scmp.eq.s32.totalorder %s23, 1
      %p61 = por %p59, %p60
      %p62 = scmp.ne.s32.totalorder %s54, %s57
      %p63 = scmp.eq.s32.totalorder %s23, 0
      %p64 = por %p62, %p63
      %p65 = scmp.ne.s32.totalorder %s54, %s57
      %p66 = scmp.eq.s32.totalorder %s28, 1
      %p67 = por %p65, %p66
      %p68 = scmp.ne.s32.totalorder %s57, %s58
      %p69 = scmp.eq.s32.totalorder %s28, 0
      %p70 = por %p68, %p69
      %p71 = scmp.ne.s32.totalorder %s57, %s58
      %p72 = scmp.eq.s32.totalorder %s29, 1
      %p73 = por %p71, %p72
      %p75 = scmp.ne.s32.totalorder %s58, %s74
      %p76 = scmp.eq.s32.totalorder %s29, 0
      %p77 = por %p75, %p76
      %s79 = sadd.s32 %s78, 1
      %p82 = scmp.eq.s32.totalorder %s23, 1
      %p83 = scmp.ne.s32.totalorder %s78, %s80
      %p84 = scmp.eq.s32.totalorder %s23, 0
      %p85 = por %p83, %p84
      %p86 = scmp.ne.s32.totalorder %s78, %s80
      %p87 = scmp.eq.s32.totalorder %s28, 1
      %p88 = por %p86, %p87
      %p89 = scmp.ne.s32.totalorder %s80, %s81
      %p90 = scmp.eq.s32.totalorder %s28, 0
      %p91 = por %p89, %p90
      %p92 = scmp.ne.s32.totalorder %s80, %s81
      %p93 = scmp.eq.s32.totalorder %s29, 1
      %p94 = por %p92, %p93
      %p96 = scmp.ne.s32.totalorder %s81, %s95
      %p97 = scmp.eq.s32.totalorder %s29, 0
      %p98 = por %p96, %p97
      %s100 = sadd.s32 %s99, 1
      %p103 = scmp.eq.s32.totalorder %s23, 1
      %p104 = scmp.ne.s32.totalorder %s99, %s101
      %p105 = scmp.eq.s32.totalorder %s23, 0
      %p106 = por %p104, %p105
      %p107 = scmp.ne.s32.totalorder %s99, %s101
      %p108 = scmp.eq.s32.totalorder %s28, 1
      %p109 = por %p107, %p108
      %p110 = scmp.ne.s32.totalorder %s101, %s102
      %p111 = scmp.eq.s32.totalorder %s28, 0
      %p112 = por %p110, %p111
      %p113 = scmp.ne.s32.totalorder %s101, %s102
      %p114 = scmp.eq.s32.totalorder %s29, 1
      %p115 = por %p113, %p114
      %p117 = scmp.ne.s32.totalorder %s102, %s116
      %p118 = scmp.eq.s32.totalorder %s29, 0
      %p119 = por %p117, %p118
      %s121 = sadd.s32 %s120, 1
      %p124 = scmp.eq.s32.totalorder %s23, 1
      %p125 = scmp.ne.s32.totalorder %s120, %s122
      %p126 = scmp.eq.s32.totalorder %s23, 0
      %p127 = por %p125, %p126
      %p128 = scmp.ne.s32.totalorder %s120, %s122
      %p129 = scmp.eq.s32.totalorder %s28, 1
      %p130 = por %p128, %p129
      %p131 = scmp.ne.s32.totalorder %s122, %s123
      %p132 = scmp.eq.s32.totalorder %s28, 0
      %p133 = por %p131, %p132
      %p134 = scmp.ne.s32.totalorder %s122, %s123
      %p135 = scmp.eq.s32.totalorder %s29, 1
      %p136 = por %p134, %p135
      %p138 = scmp.ne.s32.totalorder %s123, %s137
      %p139 = scmp.eq.s32.totalorder %s29, 0
      %p140 = por %p138, %p139
      %s142 = sadd.s32 %s141, 1
      %p145 = scmp.eq.s32.totalorder %s23, 1
      %p146 = scmp.ne.s32.totalorder %s141, %s143
      %p147 = scmp.eq.s32.totalorder %s23, 0
      %p148 = por %p146, %p147
      %p149 = scmp.ne.s32.totalorder %s141, %s143
      %p150 = scmp.eq.s32.totalorder %s28, 1
      %p151 = por %p149, %p150
      %p152 = scmp.ne.s32.totalorder %s143, %s144
      %p153 = scmp.eq.s32.totalorder %s28, 0
      %p154 = por %p152, %p153
      %p155 = scmp.ne.s32.totalorder %s143, %s144
      %p156 = scmp.eq.s32.totalorder %s29, 1
      %p157 = por %p155, %p156
      %p159 = scmp.ne.s32.totalorder %s144, %s158
      %p160 = scmp.eq.s32.totalorder %s29, 0
      %p161 = por %p159, %p160
      %s163 = sadd.s32 %s162, 1
      %p166 = scmp.eq.s32.totalorder %s23, 1
      %p167 = scmp.ne.s32.totalorder %s162, %s164
      %p168 = scmp.eq.s32.totalorder %s23, 0
      %p169 = por %p167, %p168
      %p170 = scmp.ne.s32.totalorder %s162, %s164
      %p171 = scmp.eq.s32.totalorder %s28, 1
      %p172 = por %p170, %p171
      %p173 = scmp.ne.s32.totalorder %s164, %s165
      %p174 = scmp.eq.s32.totalorder %s28, 0
      %p175 = por %p173, %p174
      %p176 = scmp.ne.s32.totalorder %s164, %s165
      %p177 = scmp.eq.s32.totalorder %s29, 1
      %p178 = por %p176, %p177
      %p180 = scmp.ne.s32.totalorder %s165, %s179
      %p181 = scmp.eq.s32.totalorder %s29, 0
      %p182 = por %p180, %p181
      %s184 = sadd.s32 %s183, 1
      %p187 = scmp.eq.s32.totalorder %s23, 1
      %p188 = scmp.ne.s32.totalorder %s183, %s185
      %p189 = scmp.eq.s32.totalorder %s23, 0
      %p190 = por %p188, %p189
      %p191 = scmp.ne.s32.totalorder %s183, %s185
      %p192 = scmp.eq.s32.totalorder %s28, 1
      %p193 = por %p191, %p192
      %p194 = scmp.ne.s32.totalorder %s185, %s186
      %p195 = scmp.eq.s32.totalorder %s28, 0
      %p196 = por %p194, %p195
      %p197 = scmp.ne.s32.totalorder %s185, %s186
      %p198 = scmp.eq.s32.totalorder %s29, 1
      %p199 = por %p197, %p198
      %p201 = scmp.ne.s32.totalorder %s186, %s200
      %p202 = scmp.eq.s32.totalorder %s29, 0
      %p203 = por %p201, %p202
      %s205 = sadd.s32 %s204, 1
      %p208 = scmp.eq.s32.totalorder %s23, 1
      %p209 = scmp.ne.s32.totalorder %s204, %s206
      %p210 = scmp.eq.s32.totalorder %s23, 0
      %p211 = por %p209, %p210
      %p212 = scmp.ne.s32.totalorder %s204, %s206
      %p213 = scmp.eq.s32.totalorder %s28, 1
      %p214 = por %p212, %p213
      %p215 = scmp.ne.s32.totalorder %s206, %s207
      %p216 = scmp.eq.s32.totalorder %s28, 0
      %p217 = por %p215, %p216
      %p218 = scmp.ne.s32.totalorder %s206, %s207
      %p219 = scmp.eq.s32.totalorder %s29, 1
      %p220 = por %p218, %p219
      %p222 = scmp.ne.s32.totalorder %s207, %s221
      %p223 = scmp.eq.s32.totalorder %s29, 0
      %p224 = por %p222, %p223
      %s226 = sadd.s32 %s225, 1
      %p229 = scmp.eq.s32.totalorder %s23, 1
      %p230 = scmp.ne.s32.totalorder %s225, %s227
      %p231 = scmp.eq.s32.totalorder %s23, 0
      %p232 = por %p230, %p231
      %p233 = scmp.ne.s32.totalorder %s225, %s227
      %p234 = scmp.eq.s32.totalorder %s28, 1
      %p235 = por %p233, %p234
      %p236 = scmp.ne.s32.totalorder %s227, %s228
      %p237 = scmp.eq.s32.totalorder %s28, 0
      %p238 = por %p236, %p237
      %p239 = scmp.ne.s32.totalorder %s227, %s228
      %p240 = scmp.eq.s32.totalorder %s29, 1
      %p241 = por %p239, %p240
      %p243 = scmp.ne.s32.totalorder %s228, %s242
      %p244 = scmp.eq.s32.totalorder %s29, 0
      %p245 = por %p243, %p244
      %s246 = ssub.s32 %s23, %s30
      %p247 = scmp.eq.s32.totalorder %s246, 0
      %s249 = sadd.s32 %s248, 1
      %s250 = scalar_select %p247, %s248, %s249
      %p253 = pneg %p247
      %p254 = scmp.eq.s32.totalorder %s23, 1
      %p255 = por %p253, %p254
      %p256 = scmp.ne.s32.totalorder %s248, %s251
      %p257 = scmp.eq.s32.totalorder %s23, 0
      %p258 = por %p256, %p257
      %p259 = scmp.ne.s32.totalorder %s248, %s251
      %p260 = scmp.eq.s32.totalorder %s28, 1
      %p261 = por %p259, %p260
      %p262 = scmp.ne.s32.totalorder %s251, %s252
      %p263 = scmp.eq.s32.totalorder %s28, 0
      %p264 = por %p262, %p263
      %p265 = scmp.ne.s32.totalorder %s251, %s252
      %p266 = scmp.eq.s32.totalorder %s29, 1
      %p267 = por %p265, %p266
      %p269 = scmp.ne.s32.totalorder %s252, %s268
      %p270 = scmp.eq.s32.totalorder %s29, 0
      %p271 = por %p269, %p270
      %p272 = scmp.le.s32.totalorder 1, %s23
      %p273 = scmp.lt.s32.totalorder %s23, 3
      %p274 = pnand %p272, %p273
      %p275 = pneg %p274
      // Predicated region
      $region9: #{tpu_custom_call.1} parent=5 // pred_check
        _
      $region10: #{tpu_custom_call.1} parent=5 // pred_check_branch
        %277 = sbr.rel (%p274) target = $region12
      $region11: #{tpu_custom_call.1} parent=5 // pred_region
        %s278 = ssub.s32 %s23, 1
        // Predicated region
        $region13: #{tpu_custom_call.1} parent=11 // pred_check
          %p279 = pneg %p44
        $region14: #{tpu_custom_call.1} parent=11 // pred_check_branch
          %281 = sbr.rel (%p279) target = $region16
        $region15: #{tpu_custom_call.1} parent=11 // pred_region
          _
        $region16: #{tpu_custom_call.1} parent=11 // pred_fallthru
          _
        // Predicated region
        $region17: #{tpu_custom_call.1} parent=11 // pred_check
          %p282 = pneg %p91
        $region18: #{tpu_custom_call.1} parent=11 // pred_check_branch
          %284 = sbr.rel (%p282) target = $region20
        $region19: #{tpu_custom_call.1} parent=11 // pred_region
          _
        $region20: #{tpu_custom_call.1} parent=11 // pred_fallthru
          _
        // Predicated region
        $region21: #{tpu_custom_call.1} parent=11 // pred_check
          %p285 = pneg %p112
        $region22: #{tpu_custom_call.1} parent=11 // pred_check_branch
          %287 = sbr.rel (%p285) target = $region24
        $region23: #{tpu_custom_call.1} parent=11 // pred_region
          _
        $region24: #{tpu_custom_call.1} parent=11 // pred_fallthru
          _
        // Predicated region
        $region25: #{tpu_custom_call.1} parent=11 // pred_check
          %p288 = pneg %p133
        $region26: #{tpu_custom_call.1} parent=11 // pred_check_branch
          %290 = sbr.rel (%p288) target = $region28
        $region27: #{tpu_custom_call.1} parent=11 // pred_region
          %s292 = ssub.s32 768, 768
          %293 = vsyncadd [#allocation5], %s292
          %s294 = sshll.u32 [#allocation4], 4
          %s295 = int_to_ptr.vmem [resolvable:$true] %s294
          %300 = dma.hbm_to_vmem [thread:$0]  %s4, 768, %s295, [#allocation5], 128, 128, 8
        $region28: #{tpu_custom_call.1} parent=11 // pred_fallthru
          _
        // Predicated region
        $region29: #{tpu_custom_call.1} parent=11 // pred_check
          %p301 = pneg %p154
        $region30: #{tpu_custom_call.1} parent=11 // pred_check_branch
          %303 = sbr.rel (%p301) target = $region32
        $region31: #{tpu_custom_call.1} parent=11 // pred_region
          _
        $region32: #{tpu_custom_call.1} parent=11 // pred_fallthru
          _
        // Predicated region
        $region33: #{tpu_custom_call.1} parent=11 // pred_check
          %p304 = pneg %p175
        $region34: #{tpu_custom_call.1} parent=11 // pred_check_branch
          %306 = sbr.rel (%p304) target = $region36
        $region35: #{tpu_custom_call.1} parent=11 // pred_region
          %s308 = ssub.s32 1024, 1024
          %309 = vsyncadd [#allocation8], %s308
          %s310 = sshll.u32 [#allocation7], 4
          %s311 = int_to_ptr.vmem [resolvable:$true] %s310
          %316 = dma.hbm_to_vmem [thread:$0]  %s6, 1024, %s311, [#allocation8], 64, 64, 4
        $region36: #{tpu_custom_call.1} parent=11 // pred_fallthru
          _
        // Predicated region
        $region37: #{tpu_custom_call.1} parent=11 // pred_check
          %p317 = pneg %p196
        $region38: #{tpu_custom_call.1} parent=11 // pred_check_branch
          %319 = sbr.rel (%p317) target = $region40
        $region39: #{tpu_custom_call.1} parent=11 // pred_region
          %s321 = ssub.s32 1024, 1024
          %322 = vsyncadd [#allocation8], %s321
          %s323 = sshll.u32 [#allocation9], 4
          %s324 = int_to_ptr.vmem [resolvable:$true] %s323
          %329 = dma.hbm_to_vmem [thread:$0]  %s7, 1024, %s324, [#allocation8], 64, 64, 4
        $region40: #{tpu_custom_call.1} parent=11 // pred_fallthru
          _
        // Predicated region
        $region41: #{tpu_custom_call.1} parent=11 // pred_check
          %p330 = pneg %p217
        $region42: #{tpu_custom_call.1} parent=11 // pred_check_branch
          %332 = sbr.rel (%p330) target = $region44
        $region43: #{tpu_custom_call.1} parent=11 // pred_region
          _
        $region44: #{tpu_custom_call.1} parent=11 // pred_fallthru
          _
        // Predicated region
        $region45: #{tpu_custom_call.1} parent=11 // pred_check
          %p333 = pneg %p238
        $region46: #{tpu_custom_call.1} parent=11 // pred_check_branch
          %335 = sbr.rel (%p333) target = $region48
        $region47: #{tpu_custom_call.1} parent=11 // pred_region
          %s337 = ssub.s32 2048, 2048
          %338 = vsyncadd [#allocation11], %s337
          %s339 = sshll.u32 [#allocation10], 4
          %s340 = int_to_ptr.vmem [resolvable:$true] %s339
          %345 = dma.hbm_to_vmem [thread:$0]  %s9, 2048, %s340, [#allocation11], 128, 128, 8
        $region48: #{tpu_custom_call.1} parent=11 // pred_fallthru
          _
      $region12: #{tpu_custom_call.1} parent=5 // pred_fallthru
        _
      %p346 = scmp.lt.s32.totalorder %s23, 2
      // Predicated region
      $region49: #{tpu_custom_call.1} parent=5 // pred_check
        %p347 = pneg %p346
      $region50: #{tpu_custom_call.1} parent=5 // pred_check_branch
        %349 = sbr.rel (%p347) target = $region52
      $region51: #{tpu_custom_call.1} parent=5 // pred_region
        // Predicated region
        $region53: #{tpu_custom_call.1} parent=51 // pred_check
          %p350 = pneg %p64
        $region54: #{tpu_custom_call.1} parent=51 // pred_check_branch
          %352 = sbr.rel (%p350) target = $region56
        $region55: #{tpu_custom_call.1} parent=51 // pred_region
          %p353 = scmp.lt.s32.totalorder %s23, 1
          %s354 = scalar_select %p353, %s23, 1
          %s355 = smul.addr %s354, 2
          %s356 = smul.addr %s355, 4
          %s357 = scalar_lea.vmem %s1, %s356
        $region56: #{tpu_custom_call.1} parent=51 // pred_fallthru
          _
      $region52: #{tpu_custom_call.1} parent=5 // pred_fallthru
        _
      %p358 = scmp.le.s32.totalorder 1, %s23
      %p359 = scmp.lt.s32.totalorder %s23, 3
      %p360 = pnand %p358, %p359
      %p361 = pneg %p360
      // Predicated region
      $region57: #{tpu_custom_call.1} parent=5 // pred_check
        _
      $region58: #{tpu_custom_call.1} parent=5 // pred_check_branch
        %363 = sbr.rel (%p360) target = $region60
      $region59: #{tpu_custom_call.1} parent=5 // pred_region
        %s364 = ssub.s32 %s23, 1
        // Predicated region
        $region61: #{tpu_custom_call.1} parent=59 // pred_check
          %p365 = pneg %p133
        $region62: #{tpu_custom_call.1} parent=59 // pred_check_branch
          %367 = sbr.rel (%p365) target = $region64
        $region63: #{tpu_custom_call.1} parent=59 // pred_region
          %368 = dma.done [#allocation5], 768
        $region64: #{tpu_custom_call.1} parent=59 // pred_fallthru
          _
        // Predicated region
        $region65: #{tpu_custom_call.1} parent=59 // pred_check
          %p369 = pneg %p175
        $region66: #{tpu_custom_call.1} parent=59 // pred_check_branch
          %371 = sbr.rel (%p369) target = $region68
        $region67: #{tpu_custom_call.1} parent=59 // pred_region
          %372 = dma.done [#allocation8], 1024
        $region68: #{tpu_custom_call.1} parent=59 // pred_fallthru
          _
        // Predicated region
        $region69: #{tpu_custom_call.1} parent=59 // pred_check
          %p373 = pneg %p196
        $region70: #{tpu_custom_call.1} parent=59 // pred_check_branch
          %375 = sbr.rel (%p373) target = $region72
        $region71: #{tpu_custom_call.1} parent=59 // pred_region
          %376 = dma.done [#allocation8], 1024
        $region72: #{tpu_custom_call.1} parent=59 // pred_fallthru
          _
        // Predicated region
        $region73: #{tpu_custom_call.1} parent=59 // pred_check
          %p377 = pneg %p238
        $region74: #{tpu_custom_call.1} parent=59 // pred_check_branch
          %379 = sbr.rel (%p377) target = $region76
        $region75: #{tpu_custom_call.1} parent=59 // pred_region
          %380 = dma.done [#allocation11], 2048
        $region76: #{tpu_custom_call.1} parent=59 // pred_fallthru
          _
        %p381 = pneg %p44
        %p382 = pneg %p41
        %p383 = scmp.lt.s32.totalorder %s28, 1
        %s384 = scalar_select %p383, %s28, 1
        %s385 = smul.addr %s384, 2
        %s386 = smul.addr %s385, 4
        %s387 = scalar_lea.vmem %s1, %s386
        %p388 = pneg %p70
        %p389 = pneg %p67
        %p390 = pneg %p91
        %p391 = pneg %p88
        %p392 = pneg %p112
        %p393 = pneg %p109
        %p394 = pneg %p133
        %p395 = pneg %p130
        %p396 = pneg %p154
        %p397 = pneg %p151
        %p398 = pneg %p175
        %p399 = pneg %p172
        %p400 = pneg %p196
        %p401 = pneg %p193
        %p402 = pneg %p217
        %p403 = pneg %p214
        %p404 = pneg %p238
        %p405 = pneg %p235
        %p406 = pneg %p264
        %p407 = pneg %p261
        %s408 = sand.u32 %s251, 1
        %s409 = scalar_lea.sflag [#allocation6], %s408
        %s410 = sand.u32 %s251, 1
        %s411 = smul.addr %s410, 8
        %s412 = scalar_lea.vmem [#allocation12], %s411
        %p413 = scmp.lt.s32.totalorder %s28, 1
        %s414 = scalar_select %p413, %s28, 1
        %s415 = smul.addr %s414, 2
        %s416 = smul.addr %s415, 4
        %s417 = scalar_lea.vmem %s1, %s416
        %s419 = sld [smem:[#allocation3]]
        %v420 = vld [vmem:[%s417] sm:$0xf]
        %v421 = vld [vmem:[%s417 + $0x4] sm:$0xf]
        %v422 = vld [vmem:[%s2] sm:$0xf]
        %v423 = vld [vmem:[%s2 + $0x4] sm:$0xf]
        %v424 = vld [vmem:[%s2 + $0x8] sm:$0xf]
        %v425 = vld [vmem:[%s2 + $0xc] sm:$0xf]
        %v426 = vld [vmem:[%s2 + $0x10] sm:$0xf]
        %v427 = vld [vmem:[%s2 + $0x14] sm:$0xf]
        %v434 = vunpack.c.l.b16 %v422
        %v435 = vunpack.c.l.b16 %v423
        %v436 = vunpack.c.l.b16 %v424
        %v437 = vunpack.c.l.b16 %v425
        %v438 = vunpack.c.l.b16 %v426
        %v439 = vunpack.c.l.b16 %v427
        %v440 = vpack.c.b16 %v435, %v434
        %v441 = vpack.c.b16 %v437, %v436
        %v442 = vpack.c.b16 %v439, %v438
        %v445 = vunpack.c.l.b16 %v420
        %v446 = vunpack.c.l.b16 %v421
        %v447 = vpack.c.b16 %v446, %v445
        %vm449 = vcmask 130048
        %v451 = vsel %vm449, %v440, 0
        %v454 = vsel %vm449, %v441, 0
        %v457 = vsel %vm449, %v442, 0
        %459 = vmatprep.subr.bf16.mxu0 0
        %460 = vmatpush1.bf16.msra.mxu0 0
        %461 = vmatprep.subr.bf16.mxu0 0
        %462 = vmatpush1.bf16.msra.mxu0 0
        %463 = vmatprep.subr.bf16.mxu0 0
        %464 = vmatpush1.bf16.msra.mxu0 0
        %465 = vmatprep.subr.bf16.mxu0 0
        %466 = vmatpush1.bf16.msra.mxu0 0
        %467 = vmatprep.subr.bf16.mxu0 0
        %468 = vmatpush1.bf16.msra.mxu0 0
        %469 = vmatprep.subr.bf16.mxu0 0
        %470 = vmatpush1.bf16.msra.mxu0 0
        %471 = vmatprep.subr.bf16.mxu0 0
        %472 = vmatpush1.bf16.msra.mxu0 0
        %473 = vmatprep.subr.bf16.mxu0 0
        %474 = vmatpush1.bf16.msra.mxu0 %v447
        %475 = vmatprep.subr.bf16.mxu0 0
        %476 = vmatpush2.bf16.msra.mxu0 0
        %477 = vmatprep.subr.bf16.mxu0 0
        %478 = vmatpush2.bf16.msra.mxu0 0
        %479 = vmatprep.subr.bf16.mxu0 0
        %480 = vmatpush2.bf16.msra.mxu0 0
        %481 = vmatprep.subr.bf16.mxu0 0
        %482 = vmatpush2.bf16.msra.mxu0 0
        %483 = vmatprep.subr.bf16.mxu0 0
        %484 = vmatpush2.bf16.msra.mxu0 0
        %485 = vmatprep.subr.bf16.mxu0 0
        %486 = vmatpush2.bf16.msra.mxu0 0
        %487 = vmatprep.subr.bf16.mxu0 0
        %488 = vmatpush2.bf16.msra.mxu0 0
        %489 = vmatprep.subr.bf16.mxu0 0
        %490 = vmatpush2.bf16.msra.mxu0 0
        %491 = vmatprep.mubr.bf16.mxu0 0
        %492 = vmatmul.mubr.bf16.gmra.mxu0 %v451
        %v493 = vpop.f32.mrf.mxu0
        %v494 = vadd.f32 0.0, %v493
        %v495 = vpop.f32.mrf.mxu0
        %v496 = vpop.f32.mrf.mxu0
        %v497 = vadd.f32 0.0, %v496
        %v498 = vpop.f32.mrf.mxu0
        %499 = vmatprep.mubr.bf16.mxu0 0
        %500 = vmatmul.mubr.bf16.gmra.mxu0 %v454
        %v501 = vpop.f32.mrf.mxu0
        %v502 = vadd.f32 0.0, %v501
        %v503 = vpop.f32.mrf.mxu0
        %v504 = vpop.f32.mrf.mxu0
        %v505 = vadd.f32 0.0, %v504
        %v506 = vpop.f32.mrf.mxu0
        %507 = vmatprep.mubr.bf16.mxu0 0
        %508 = vmatmul.mubr.bf16.gmra.mxu0 %v457
        %v509 = vpop.f32.mrf.mxu0
        %v510 = vadd.f32 0.0, %v509
        %v511 = vpop.f32.mrf.mxu0
        %v512 = vpop.f32.mrf.mxu0
        %v513 = vadd.f32 0.0, %v512
        %v514 = vpop.f32.mrf.mxu0
        %515 = vdwg.mxu0
        %v516 = vstv %s419
        %v517 = vmul.f32 %v516, %v494
        %v518 = vmul.f32 %v516, %v497
        %v519 = vmul.f32 %v516, %v502
        %v520 = vmul.f32 %v516, %v505
        %v521 = vmul.f32 %v516, %v510
        %v522 = vmul.f32 %v516, %v513
        %v523 = vld [vmem:[#allocation4] sm:$0xff]
        %v524 = vld [vmem:[#allocation4 + $0x8] sm:$0xff]
        %v525 = vld [vmem:[#allocation4 + $0x10] sm:$0xff]
        %v526 = vld [vmem:[#allocation4 + $0x18] sm:$0xff]
        %v527 = vld [vmem:[#allocation4 + $0x20] sm:$0xff]
        %v528 = vld [vmem:[#allocation4 + $0x28] sm:$0xff]
        %v529 = vadd.f32 %v517, %v523
        %v530 = vadd.f32 %v518, %v524
        %v531 = vadd.f32 %v519, %v525
        %v532 = vadd.f32 %v520, %v526
        %v533 = vadd.f32 %v521, %v527
        %v534 = vadd.f32 %v522, %v528
        %v535 = vmul.f32 %v529, %v530
        %v536 = vmul.f32 %v535, %v531
        %v537 = vmul.f32 %v536, %v532
        %v538 = vmul.f32 %v537, %v533
        %v539 = vmul.f32 %v534, %v533
        %v540 = vmul.f32 %v539, %v532
        %v541 = vmul.f32 %v540, %v531
        %v542 = vmul.f32 %v541, %v530
        %v543 = vld [vmem:[%s5] sm:$0xff]
        %v544 = vmul.f32 %v542, %v543
        %545 = vst [vmem:[#allocation2] sm:$0xff] %v544
        %v546 = vmul.f32 %v529, %v541
        %v547 = vmul.f32 %v546, %v543
        %548 = vst [vmem:[#allocation2 + $0x8] sm:$0xff] %v547
        %v549 = vmul.f32 %v535, %v540
        %v550 = vmul.f32 %v549, %v543
        %551 = vst [vmem:[#allocation2 + $0x10] sm:$0xff] %v550
        %v552 = vmul.f32 %v536, %v539
        %v553 = vmul.f32 %v552, %v543
        %554 = vst [vmem:[#allocation2 + $0x18] sm:$0xff] %v553
        %v555 = vmul.f32 %v537, %v534
        %v556 = vmul.f32 %v555, %v543
        %557 = vst [vmem:[#allocation2 + $0x20] sm:$0xff] %v556
        %v558 = vmul.f32 %v538, %v543
        %559 = vst [vmem:[#allocation2 + $0x28] sm:$0xff] %v558
        %v560 = vld [vmem:[#allocation2] sm:$0xff]
        %v561 = vld [vmem:[#allocation2 + $0x8] sm:$0xff]
        %v562 = vld [vmem:[#allocation2 + $0x10] sm:$0xff]
        %v563 = vld [vmem:[#allocation2 + $0x18] sm:$0xff]
        %v564 = vld [vmem:[#allocation2 + $0x20] sm:$0xff]
        %v565 = vld [vmem:[#allocation2 + $0x28] sm:$0xff]
        %v566 = vpack.c.bf16 %v561, %v560
        %v567 = vpack.c.bf16 %v563, %v562
        %v568 = vpack.c.bf16 %v565, %v564
        %v569 = vld [vmem:[%s3] sm:$0xf]
        %v570 = vld [vmem:[%s3 + $0x4] sm:$0xf]
        %v573 = vunpack.c.l.b16 %v569
        %v574 = vunpack.c.l.b16 %v570
        %v575 = vpack.c.b16 %v574, %v573
        %vm576 = vcmask 392192
        %v578 = vsel %vm576, %v575, 0
        %580 = vmatprep.subr.bf16.mxu0 0
        %581 = vmatpush1.bf16.msra.mxu0 0
        %582 = vmatprep.subr.bf16.mxu0 0
        %583 = vmatpush1.bf16.msra.mxu0 0
        %584 = vmatprep.subr.bf16.mxu0 0
        %585 = vmatpush1.bf16.msra.mxu0 0
        %586 = vmatprep.subr.bf16.mxu0 0
        %587 = vmatpush1.bf16.msra.mxu0 0
        %588 = vmatprep.subr.bf16.mxu0 0
        %589 = vmatpush1.bf16.msra.mxu0 0
        %590 = vmatprep.subr.bf16.mxu0 0
        %591 = vmatpush1.bf16.msra.mxu0 %v568
        %592 = vmatprep.subr.bf16.mxu0 0
        %593 = vmatpush1.bf16.msra.mxu0 %v567
        %594 = vmatprep.subr.bf16.mxu0 0
        %595 = vmatpush1.bf16.msra.mxu0 %v566
        %596 = vmatprep.subr.bf16.mxu0 0
        %597 = vmatpush2.bf16.msra.mxu0 0
        %598 = vmatprep.subr.bf16.mxu0 0
        %599 = vmatpush2.bf16.msra.mxu0 0
        %600 = vmatprep.subr.bf16.mxu0 0
        %601 = vmatpush2.bf16.msra.mxu0 0
        %602 = vmatprep.subr.bf16.mxu0 0
        %603 = vmatpush2.bf16.msra.mxu0 0
        %604 = vmatprep.subr.bf16.mxu0 0
        %605 = vmatpush2.bf16.msra.mxu0 0
        %606 = vmatprep.subr.bf16.mxu0 0
        %607 = vmatpush2.bf16.msra.mxu0 0
        %608 = vmatprep.subr.bf16.mxu0 0
        %609 = vmatpush2.bf16.msra.mxu0 0
        %610 = vmatprep.subr.bf16.mxu0 0
        %611 = vmatpush2.bf16.msra.mxu0 0
        %612 = vmatprep.mubr.bf16.mxu0 0
        %613 = vmatmul.mubr.bf16.gmra.mxu0 %v578
        %v614 = vpop.f32.mrf.mxu0
        %v615 = vadd.f32 0.0, %v614
        %v616 = vpop.f32.mrf.mxu0
        %v617 = vpop.f32.mrf.mxu0
        %v618 = vadd.f32 0.0, %v617
        %v619 = vpop.f32.mrf.mxu0
        %620 = vdwg.mxu0
        %v621 = vpack.c.bf16 %v618, %v615
        %v622 = vld [vmem:[#allocation7] sm:$0xf]
        %v623 = vld [vmem:[#allocation7 + $0x4] sm:$0xf]
        %v624 = vld [vmem:[#allocation7 + $0x8] sm:$0xf]
        %v625 = vld [vmem:[#allocation7 + $0xc] sm:$0xf]
        %v626 = vld [vmem:[#allocation7 + $0x10] sm:$0xf]
        %v627 = vld [vmem:[#allocation7 + $0x14] sm:$0xf]
        %v628 = vld [vmem:[#allocation7 + $0x18] sm:$0xf]
        %v629 = vld [vmem:[#allocation7 + $0x1c] sm:$0xf]
        %v630 = vld [vmem:[#allocation7 + $0x20] sm:$0xf]
        %v631 = vld [vmem:[#allocation7 + $0x24] sm:$0xf]
        %v632 = vld [vmem:[#allocation7 + $0x28] sm:$0xf]
        %v633 = vld [vmem:[#allocation7 + $0x2c] sm:$0xf]
        %v634 = vld [vmem:[#allocation7 + $0x30] sm:$0xf]
        %v635 = vld [vmem:[#allocation7 + $0x34] sm:$0xf]
        %v636 = vld [vmem:[#allocation7 + $0x38] sm:$0xf]
        %v637 = vld [vmem:[#allocation7 + $0x3c] sm:$0xf]
        %v638 = vld [vmem:[#allocation9] sm:$0xf]
        %v639 = vld [vmem:[#allocation9 + $0x4] sm:$0xf]
        %v640 = vld [vmem:[#allocation9 + $0x8] sm:$0xf]
        %v641 = vld [vmem:[#allocation9 + $0xc] sm:$0xf]
        %v642 = vld [vmem:[#allocation9 + $0x10] sm:$0xf]
        %v643 = vld [vmem:[#allocation9 + $0x14] sm:$0xf]
        %v644 = vld [vmem:[#allocation9 + $0x18] sm:$0xf]
        %v645 = vld [vmem:[#allocation9 + $0x1c] sm:$0xf]
        %v646 = vld [vmem:[#allocation9 + $0x20] sm:$0xf]
        %v647 = vld [vmem:[#allocation9 + $0x24] sm:$0xf]
        %v648 = vld [vmem:[#allocation9 + $0x28] sm:$0xf]
        %v649 = vld [vmem:[#allocation9 + $0x2c] sm:$0xf]
        %v650 = vld [vmem:[#allocation9 + $0x30] sm:$0xf]
        %v651 = vld [vmem:[#allocation9 + $0x34] sm:$0xf]
        %v652 = vld [vmem:[#allocation9 + $0x38] sm:$0xf]
        %v653 = vld [vmem:[#allocation9 + $0x3c] sm:$0xf]
        %v670 = vunpack.c.l.b16 %v638
        %v671 = vunpack.c.l.b16 %v639
        %v672 = vunpack.c.l.b16 %v640
        %v673 = vunpack.c.l.b16 %v641
        %v674 = vunpack.c.l.b16 %v642
        %v675 = vunpack.c.l.b16 %v643
        %v676 = vunpack.c.l.b16 %v644
        %v677 = vunpack.c.l.b16 %v645
        %v678 = vunpack.c.l.b16 %v646
        %v679 = vunpack.c.l.b16 %v647
        %v680 = vunpack.c.l.b16 %v648
        %v681 = vunpack.c.l.b16 %v649
        %v682 = vunpack.c.l.b16 %v650
        %v683 = vunpack.c.l.b16 %v651
        %v684 = vunpack.c.l.b16 %v652
        %v685 = vunpack.c.l.b16 %v653
        %v686 = vpack.c.b16 %v671, %v670
        %v687 = vpack.c.b16 %v673, %v672
        %v688 = vpack.c.b16 %v675, %v674
        %v689 = vpack.c.b16 %v677, %v676
        %v690 = vpack.c.b16 %v679, %v678
        %v691 = vpack.c.b16 %v681, %v680
        %v692 = vpack.c.b16 %v683, %v682
        %v693 = vpack.c.b16 %v685, %v684
        %702 = vmatprep.subr.bf16.mxu0 0
        %703 = vmatpush1.bf16.msra.mxu0 %v693
        %704 = vmatprep.subr.bf16.mxu0 0
        %705 = vmatpush1.bf16.msra.mxu0 %v692
        %706 = vmatprep.subr.bf16.mxu0 0
        %707 = vmatpush1.bf16.msra.mxu0 %v691
        %708 = vmatprep.subr.bf16.mxu0 0
        %709 = vmatpush1.bf16.msra.mxu0 %v690
        %710 = vmatprep.subr.bf16.mxu0 0
        %711 = vmatpush1.bf16.msra.mxu0 %v689
        %712 = vmatprep.subr.bf16.mxu0 0
        %713 = vmatpush1.bf16.msra.mxu0 %v688
        %714 = vmatprep.subr.bf16.mxu0 0
        %715 = vmatpush1.bf16.msra.mxu0 %v687
        %716 = vmatprep.subr.bf16.mxu0 0
        %717 = vmatpush1.bf16.msra.mxu0 %v686
        %718 = vmatprep.subr.bf16.mxu0 0
        %719 = vmatpush2.bf16.msra.mxu0 0
        %720 = vmatprep.subr.bf16.mxu0 0
        %721 = vmatpush2.bf16.msra.mxu0 0
        %722 = vmatprep.subr.bf16.mxu0 0
        %723 = vmatpush2.bf16.msra.mxu0 0
        %724 = vmatprep.subr.bf16.mxu0 0
        %725 = vmatpush2.bf16.msra.mxu0 0
        %726 = vmatprep.subr.bf16.mxu0 0
        %727 = vmatpush2.bf16.msra.mxu0 0
        %728 = vmatprep.subr.bf16.mxu0 0
        %729 = vmatpush2.bf16.msra.mxu0 0
        %730 = vmatprep.subr.bf16.mxu0 0
        %731 = vmatpush2.bf16.msra.mxu0 0
        %732 = vmatprep.subr.bf16.mxu0 0
        %733 = vmatpush2.bf16.msra.mxu0 0
        %734 = vmatprep.mubr.bf16.mxu0 0
        %735 = vmatmul.mubr.bf16.gmra.mxu0 %v447
        %v736 = vpop.f32.mrf.mxu0
        %v737 = vadd.f32 0.0, %v736
        %v738 = vpop.f32.mrf.mxu0
        %v739 = vpop.f32.mrf.mxu0
        %v740 = vadd.f32 0.0, %v739
        %v741 = vpop.f32.mrf.mxu0
        %742 = vdwg.mxu0
        %v759 = vunpack.c.l.b16 %v622
        %v760 = vunpack.c.l.b16 %v623
        %v761 = vunpack.c.l.b16 %v624
        %v762 = vunpack.c.l.b16 %v625
        %v763 = vunpack.c.l.b16 %v626
        %v764 = vunpack.c.l.b16 %v627
        %v765 = vunpack.c.l.b16 %v628
        %v766 = vunpack.c.l.b16 %v629
        %v767 = vunpack.c.l.b16 %v630
        %v768 = vunpack.c.l.b16 %v631
        %v769 = vunpack.c.l.b16 %v632
        %v770 = vunpack.c.l.b16 %v633
        %v771 = vunpack.c.l.b16 %v634
        %v772 = vunpack.c.l.b16 %v635
        %v773 = vunpack.c.l.b16 %v636
        %v774 = vunpack.c.l.b16 %v637
        %v775 = vpack.c.b16 %v760, %v759
        %v776 = vpack.c.b16 %v762, %v761
        %v777 = vpack.c.b16 %v764, %v763
        %v778 = vpack.c.b16 %v766, %v765
        %v779 = vpack.c.b16 %v768, %v767
        %v780 = vpack.c.b16 %v770, %v769
        %v781 = vpack.c.b16 %v772, %v771
        %v782 = vpack.c.b16 %v774, %v773
        %791 = vmatprep.subr.bf16.mxu0 0
        %792 = vmatpush1.bf16.msra.mxu0 %v782
        %793 = vmatprep.subr.bf16.mxu0 0
        %794 = vmatpush1.bf16.msra.mxu0 %v781
        %795 = vmatprep.subr.bf16.mxu0 0
        %796 = vmatpush1.bf16.msra.mxu0 %v780
        %797 = vmatprep.subr.bf16.mxu0 0
        %798 = vmatpush1.bf16.msra.mxu0 %v779
        %799 = vmatprep.subr.bf16.mxu0 0
        %800 = vmatpush1.bf16.msra.mxu0 %v778
        %801 = vmatprep.subr.bf16.mxu0 0
        %802 = vmatpush1.bf16.msra.mxu0 %v777
        %803 = vmatprep.subr.bf16.mxu0 0
        %804 = vmatpush1.bf16.msra.mxu0 %v776
        %805 = vmatprep.subr.bf16.mxu0 0
        %806 = vmatpush1.bf16.msra.mxu0 %v775
        %807 = vmatprep.subr.bf16.mxu0 0
        %808 = vmatpush2.bf16.msra.mxu0 0
        %809 = vmatprep.subr.bf16.mxu0 0
        %810 = vmatpush2.bf16.msra.mxu0 0
        %811 = vmatprep.subr.bf16.mxu0 0
        %812 = vmatpush2.bf16.msra.mxu0 0
        %813 = vmatprep.subr.bf16.mxu0 0
        %814 = vmatpush2.bf16.msra.mxu0 0
        %815 = vmatprep.subr.bf16.mxu0 0
        %816 = vmatpush2.bf16.msra.mxu0 0
        %817 = vmatprep.subr.bf16.mxu0 0
        %818 = vmatpush2.bf16.msra.mxu0 0
        %819 = vmatprep.subr.bf16.mxu0 0
        %820 = vmatpush2.bf16.msra.mxu0 0
        %821 = vmatprep.subr.bf16.mxu0 0
        %822 = vmatpush2.bf16.msra.mxu0 0
        %823 = vmatprep.mubr.bf16.mxu0 0
        %824 = vmatmul.mubr.bf16.gmra.mxu0 %v621
        %v825 = vpop.f32.mrf.mxu0
        %v826 = vadd.f32 %v737, %v825
        %v827 = vpop.f32.mrf.mxu0
        %v828 = vpop.f32.mrf.mxu0
        %v829 = vadd.f32 %v740, %v828
        %v830 = vpop.f32.mrf.mxu0
        %831 = vdwg.mxu0
        %v832 = vld [vmem:[%s8] sm:$0x1]
        %v833 = vlaneseq
        %v834 = vshrl.u32 %v833, 7
        %v835 = vsub.s32 0, %v834
        %v836 = vrot.slane %v832, %v835
        %v837 = vadd.f32 %v826, %v836
        %v838 = vadd.f32 %v829, %v836
        %v839 = vld [vmem:[#allocation10] sm:$0xff]
        %v840 = vld [vmem:[#allocation10 + $0x8] sm:$0xff]
        %v841 = vld [vmem:[#allocation10 + $0x10] sm:$0xff]
        %v842 = vld [vmem:[#allocation10 + $0x18] sm:$0xff]
        %v843 = vld [vmem:[#allocation10 + $0x20] sm:$0xff]
        %v844 = vld [vmem:[#allocation10 + $0x28] sm:$0xff]
        %v845 = vld [vmem:[#allocation10 + $0x30] sm:$0xff]
        %v846 = vld [vmem:[#allocation10 + $0x38] sm:$0xff]
        %v847 = vld [vmem:[#allocation10 + $0x40] sm:$0xff]
        %v848 = vld [vmem:[#allocation10 + $0x48] sm:$0xff]
        %v849 = vld [vmem:[#allocation10 + $0x50] sm:$0xff]
        %v850 = vld [vmem:[#allocation10 + $0x58] sm:$0xff]
        %v851 = vld [vmem:[#allocation10 + $0x60] sm:$0xff]
        %v852 = vld [vmem:[#allocation10 + $0x68] sm:$0xff]
        %v853 = vld [vmem:[#allocation10 + $0x70] sm:$0xff]
        %v854 = vld [vmem:[#allocation10 + $0x78] sm:$0xff]
        %855 = vmatprep.subr.mxu0 0.0
        %856 = vmatpush1.msra.mxu0 %v854
        %857 = vmatprep.subr.mxu0 0.0
        %858 = vmatpush1.msra.mxu0 %v853
        %859 = vmatprep.subr.mxu0 0.0
        %860 = vmatpush1.msra.mxu0 %v852
        %861 = vmatprep.subr.mxu0 0.0
        %862 = vmatpush1.msra.mxu0 %v851
        %863 = vmatprep.subr.mxu0 0.0
        %864 = vmatpush1.msra.mxu0 %v850
        %865 = vmatprep.subr.mxu0 0.0
        %866 = vmatpush1.msra.mxu0 %v849
        %867 = vmatprep.subr.mxu0 0.0
        %868 = vmatpush1.msra.mxu0 %v848
        %869 = vmatprep.subr.mxu0 0.0
        %870 = vmatpush1.msra.mxu0 %v847
        %871 = vmatprep.subr.mxu0 0.0
        %872 = vmatpush1.msra.mxu0 %v846
        %873 = vmatprep.subr.mxu0 0.0
        %874 = vmatpush1.msra.mxu0 %v845
        %875 = vmatprep.subr.mxu0 0.0
        %876 = vmatpush1.msra.mxu0 %v844
        %877 = vmatprep.subr.mxu0 0.0
        %878 = vmatpush1.msra.mxu0 %v843
        %879 = vmatprep.subr.mxu0 0.0
        %880 = vmatpush1.msra.mxu0 %v842
        %881 = vmatprep.subr.mxu0 0.0
        %882 = vmatpush1.msra.mxu0 %v841
        %883 = vmatprep.subr.mxu0 0.0
        %884 = vmatpush1.msra.mxu0 %v840
        %885 = vmatprep.subr.mxu0 0.0
        %886 = vmatpush1.msra.mxu0 %v839
        %887 = vmatprep.subr.mxu0 0.0
        %888 = vmatpush2.msra.mxu0 0.0
        %889 = vmatprep.subr.mxu0 0.0
        %890 = vmatpush2.msra.mxu0 0.0
        %891 = vmatprep.subr.mxu0 0.0
        %892 = vmatpush2.msra.mxu0 0.0
        %893 = vmatprep.subr.mxu0 0.0
        %894 = vmatpush2.msra.mxu0 0.0
        %895 = vmatprep.subr.mxu0 0.0
        %896 = vmatpush2.msra.mxu0 0.0
        %897 = vmatprep.subr.mxu0 0.0
        %898 = vmatpush2.msra.mxu0 0.0
        %899 = vmatprep.subr.mxu0 0.0
        %900 = vmatpush2.msra.mxu0 0.0
        %901 = vmatprep.subr.mxu0 0.0
        %902 = vmatpush2.msra.mxu0 0.0
        %903 = vmatprep.subr.mxu0 0.0
        %904 = vmatpush2.msra.mxu0 0.0
        %905 = vmatprep.subr.mxu0 0.0
        %906 = vmatpush2.msra.mxu0 0.0
        %907 = vmatprep.subr.mxu0 0.0
        %908 = vmatpush2.msra.mxu0 0.0
        %909 = vmatprep.subr.mxu0 0.0
        %910 = vmatpush2.msra.mxu0 0.0
        %911 = vmatprep.subr.mxu0 0.0
        %912 = vmatpush2.msra.mxu0 0.0
        %913 = vmatprep.subr.mxu0 0.0
        %914 = vmatpush2.msra.mxu0 0.0
        %915 = vmatprep.subr.mxu0 0.0
        %916 = vmatpush2.msra.mxu0 0.0
        %917 = vmatprep.subr.mxu0 0.0
        %918 = vmatpush2.msra.mxu0 0.0
        %919 = vmatprep.mubr.f32.mxu0 0.0
        %920 = vmatmul.mubr.f32.gmra.mxu0 %v837
        %v921 = vpop.f32.mrf.mxu0
        %v922 = vadd.f32 0.0, %v921
        %v923 = vpop.f32.mrf.mxu0
        %924 = vmatprep.mubr.f32.mxu0 0.0
        %925 = vmatmul.mubr.f32.gmra.mxu0 %v838
        %v926 = vpop.f32.mrf.mxu0
        %v927 = vadd.f32 0.0, %v926
        %v928 = vpop.f32.mrf.mxu0
        %929 = vdwg.mxu0
        %v930 = vsub.f32 %v837, %v922
        %v931 = vsub.f32 %v838, %v927
        %v932 = vmul.f32 %v930, %v930
        %v933 = vmul.f32 %v931, %v931
        %934 = vmatprep.subr.mxu0 0.0
        %935 = vmatpush1.msra.mxu0 %v854
        %936 = vmatprep.subr.mxu0 0.0
        %937 = vmatpush1.msra.mxu0 %v853
        %938 = vmatprep.subr.mxu0 0.0
        %939 = vmatpush1.msra.mxu0 %v852
        %940 = vmatprep.subr.mxu0 0.0
        %941 = vmatpush1.msra.mxu0 %v851
        %942 = vmatprep.subr.mxu0 0.0
        %943 = vmatpush1.msra.mxu0 %v850
        %944 = vmatprep.subr.mxu0 0.0
        %945 = vmatpush1.msra.mxu0 %v849
        %946 = vmatprep.subr.mxu0 0.0
        %947 = vmatpush1.msra.mxu0 %v848
        %948 = vmatprep.subr.mxu0 0.0
        %949 = vmatpush1.msra.mxu0 %v847
        %950 = vmatprep.subr.mxu0 0.0
        %951 = vmatpush1.msra.mxu0 %v846
        %952 = vmatprep.subr.mxu0 0.0
        %953 = vmatpush1.msra.mxu0 %v845
        %954 = vmatprep.subr.mxu0 0.0
        %955 = vmatpush1.msra.mxu0 %v844
        %956 = vmatprep.subr.mxu0 0.0
        %957 = vmatpush1.msra.mxu0 %v843
        %958 = vmatprep.subr.mxu0 0.0
        %959 = vmatpush1.msra.mxu0 %v842
        %960 = vmatprep.subr.mxu0 0.0
        %961 = vmatpush1.msra.mxu0 %v841
        %962 = vmatprep.subr.mxu0 0.0
        %963 = vmatpush1.msra.mxu0 %v840
        %964 = vmatprep.subr.mxu0 0.0
        %965 = vmatpush1.msra.mxu0 %v839
        %966 = vmatprep.subr.mxu0 0.0
        %967 = vmatpush2.msra.mxu0 0.0
        %968 = vmatprep.subr.mxu0 0.0
        %969 = vmatpush2.msra.mxu0 0.0
        %970 = vmatprep.subr.mxu0 0.0
        %971 = vmatpush2.msra.mxu0 0.0
        %972 = vmatprep.subr.mxu0 0.0
        %973 = vmatpush2.msra.mxu0 0.0
        %974 = vmatprep.subr.mxu0 0.0
        %975 = vmatpush2.msra.mxu0 0.0
        %976 = vmatprep.subr.mxu0 0.0
        %977 = vmatpush2.msra.mxu0 0.0
        %978 = vmatprep.subr.mxu0 0.0
        %979 = vmatpush2.msra.mxu0 0.0
        %980 = vmatprep.subr.mxu0 0.0
        %981 = vmatpush2.msra.mxu0 0.0
        %982 = vmatprep.subr.mxu0 0.0
        %983 = vmatpush2.msra.mxu0 0.0
        %984 = vmatprep.subr.mxu0 0.0
        %985 = vmatpush2.msra.mxu0 0.0
        %986 = vmatprep.subr.mxu0 0.0
        %987 = vmatpush2.msra.mxu0 0.0
        %988 = vmatprep.subr.mxu0 0.0
        %989 = vmatpush2.msra.mxu0 0.0
        %990 = vmatprep.subr.mxu0 0.0
        %991 = vmatpush2.msra.mxu0 0.0
        %992 = vmatprep.subr.mxu0 0.0
        %993 = vmatpush2.msra.mxu0 0.0
        %994 = vmatprep.subr.mxu0 0.0
        %995 = vmatpush2.msra.mxu0 0.0
        %996 = vmatprep.subr.mxu0 0.0
        %997 = vmatpush2.msra.mxu0 0.0
        %998 = vmatprep.mubr.f32.mxu0 0.0
        %999 = vmatmul.mubr.f32.gmra.mxu0 %v932
        %v1000 = vpop.f32.mrf.mxu0
        %v1001 = vadd.f32 1e-05, %v1000
        %v1002 = vpop.f32.mrf.mxu0
        %1003 = vmatprep.mubr.f32.mxu0 0.0
        %1004 = vmatmul.mubr.f32.gmra.mxu0 %v933
        %v1005 = vpop.f32.mrf.mxu0
        %v1006 = vadd.f32 1e-05, %v1005
        %v1007 = vpop.f32.mrf.mxu0
        %1008 = vdwg.mxu0
        %v1009 = vrsqrt.pop %v1001
        %v1010 = vrsqrt.pop %v1006
        %v1011 = vmul.f32 %v930, %v1009
        %v1012 = vmul.f32 %v931, %v1010
        %v1013 = vld [vmem:[%s8 + $0x1] sm:$0x1]
        %v1014 = vlaneseq
        %v1015 = vshrl.u32 %v1014, 7
        %v1016 = vsub.s32 0, %v1015
        %v1017 = vrot.slane %v1013, %v1016
        %v1018 = vmul.f32 %v1011, %v1017
        %v1019 = vmul.f32 %v1012, %v1017
        %v1020 = vld [vmem:[%s8 + $0x2] sm:$0x1]
        %v1021 = vlaneseq
        %v1022 = vshrl.u32 %v1021, 7
        %v1023 = vsub.s32 0, %v1022
        %v1024 = vrot.slane %v1020, %v1023
        %v1025 = vadd.f32 %v1018, %v1024
        %v1026 = vadd.f32 %v1019, %v1024
        %v1027 = vpack.c.bf16 %v1026, %v1025
        %v1029 = vunpack.c.l.b16 %v1027
        %v1030 = vunpack.c.h.b16 %v1027
        %v1031 = vpack.c.b16 %v1029, %v1029
        %v1032 = vpack.c.b16 %v1030, %v1030
        %1035 = vst [vmem:[%s412] sm:$0xf] %v1031
        %1036 = vst [vmem:[%s412 + $0x4] sm:$0xf] %v1032
        %s1037 = sand.u32 %s251, 1
        %s1038 = scalar_lea.sflag [#allocation6], %s1037
        %s1039 = sand.u32 %s251, 1
        %s1040 = smul.addr %s1039, 8
        %s1041 = scalar_lea.vmem [#allocation12], %s1040
        // Predicated region
        $region77: #{tpu_custom_call.1} parent=59 // pred_check
          %p1042 = pneg %p261
        $region78: #{tpu_custom_call.1} parent=59 // pred_check_branch
          %1044 = sbr.rel (%p1042) target = $region80
        $region79: #{tpu_custom_call.1} parent=59 // pred_region
          %s1046 = ssub.s32 128, 128
          %1047 = vsyncadd %s1038, %s1046
          %s1048 = smul.addr %s28, 2
          %s1049 = smul.addr %s1048, 64
          %s1050 = scalar_lea.hbm %s10, %s1049
          %s1051 = sshll.u32 %s1041, 4
          %s1052 = int_to_ptr.vmem [resolvable:$true] %s1051
          %1057 = dma.vmem_to_hbm [thread:$0]  %s1052, 128, %s1050, %s1038, 64, 64, 4
        $region80: #{tpu_custom_call.1} parent=59 // pred_fallthru
          _
      $region60: #{tpu_custom_call.1} parent=5 // pred_fallthru
        _
      %p1058 = scmp.le.s32.totalorder 2, %s23
      // Predicated region
      $region81: #{tpu_custom_call.1} parent=5 // pred_check
        %p1059 = pneg %p1058
      $region82: #{tpu_custom_call.1} parent=5 // pred_check_branch
        %1061 = sbr.rel (%p1059) target = $region84
      $region83: #{tpu_custom_call.1} parent=5 // pred_region
        %s1062 = ssub.s32 %s23, 2
        // Predicated region
        $region85: #{tpu_custom_call.1} parent=83 // pred_check
          %p1063 = pneg %p267
        $region86: #{tpu_custom_call.1} parent=83 // pred_check_branch
          %1065 = sbr.rel (%p1063) target = $region88
        $region87: #{tpu_custom_call.1} parent=83 // pred_region
          %s1066 = sand.u32 %s252, 1
          %s1067 = scalar_lea.sflag [#allocation6], %s1066
          %s1068 = sand.u32 %s252, 1
          %s1069 = smul.addr %s1068, 8
          %s1070 = scalar_lea.vmem [#allocation12], %s1069
          %1071 = dma.done %s1067, 128
        $region88: #{tpu_custom_call.1} parent=83 // pred_fallthru
          _
      $region84: #{tpu_custom_call.1} parent=5 // pred_fallthru
        _
    $region6: #{tpu_custom_call.1} parent=1 // loop_footer
      %s27 = sadd.s32 1, %s23
    $region7: #{tpu_custom_call.1} parent=1 // loop_footer_branch
      %22 = sbr.rel target = $region3
    $region8: #{tpu_custom_call.1} parent=1 // loop_exit
      _
    %1072 = vsyncpa [#allocation5], 1
    %s1073 = scalar_lea.sflag [#allocation5], 1
    %1074 = vsyncpa %s1073, 1
    %1075 = vsyncpa [#allocation8], 1
    %1076 = vsyncpa [#allocation11], 1
    %1077 = vsyncpa [#allocation6], 1
    %s1078 = scalar_lea.sflag [#allocation6], 1
    %1079 = vsyncpa %s1078, 1

</llo_original>
